<compile_context>
chip_gen: v7x
topology: tpu7x:2x2x1
jax: 0.10.0
libtpu: 0.0.40
codegen_flags: <defaults>
</compile_context>

<pallas_src>
import functools

import jax
import jax.numpy as jnp
import numpy as np
from jax.experimental import pallas as pl
from jax.experimental.pallas import tpu as pltpu


def _round_up(x: int, m: int) -> int:
    return ((x + m - 1) // m) * m


def _decoder_kernel(z_ref, w1t_ref, b1_ref, w2t_ref, b2_ref, out_ref):
    # z_ref:   (TB, z_dim)            VMEM (pipelined per grid step)
    # w1t_ref: (z_dim, hidden_dim)    VMEM (resident: constant index_map)
    # b1_ref:  (1, hidden_dim)        VMEM (resident)
    # w2t_ref: (hidden_dim, out_pad)  VMEM (resident)
    # b2_ref:  (1, out_pad)           VMEM (resident)
    # out_ref: (TB, out_pad)          VMEM (pipelined per grid step)

    # fc1 on the MXU, f32 accumulation.
    h = jnp.dot(z_ref[...], w1t_ref[...], preferred_element_type=jnp.float32)
    h = h + b1_ref[...]                     # (1, H) broadcasts over TB rows

    # Softplus = log(1 + exp(x)) -- numerically stable form (EUP exp/log).
    h = jnp.logaddexp(h, 0.0)

    # fc21 on the MXU, f32 accumulation.  Padded output columns are zeros in
    # W2^T / b2, so they produce zeros and are sliced off by the wrapper.
    out = jnp.dot(h, w2t_ref[...], preferred_element_type=jnp.float32)
    out = out + b2_ref[...]

    out_ref[...] = out.astype(out_ref.dtype)


def prepare_decoder_params(w1, b1, w2, b2):
    """One-time parameter prep (hoisted out of the per-call path).

    w1: (hidden_dim, z_dim), b1: (hidden_dim,)      -- PyTorch Linear layout
    w2: (output_dim, hidden_dim), b2: (output_dim,)

    Returns (w1t, b1_2d, w2t_pad, b2_pad, output_dim) where the second matmul
    operands are zero-padded so the kernel's output last dim is a multiple of
    128 (lane-dense, unmasked stores).
    """
    hidden_dim, z_dim = w1.shape
    output_dim, _ = w2.shape
    out_pad = _round_up(output_dim, 128)

    w1t = jnp.asarray(w1, jnp.float32).T                      # (z_dim, hidden)
    b1_2d = jnp.reshape(jnp.asarray(b1, jnp.float32), (1, hidden_dim))

    w2t = jnp.zeros((hidden_dim, out_pad), jnp.float32)
    w2t = w2t.at[:, :output_dim].set(jnp.asarray(w2, jnp.float32).T)
    b2_2d = jnp.zeros((1, out_pad), jnp.float32)
    b2_2d = b2_2d.at[:, :output_dim].set(jnp.asarray(b2, jnp.float32))

    return w1t, b1_2d, w2t, b2_2d, output_dim


def _pick_block_b(B: int) -> int:
    """Batch tile: multiple of 8, capped at 1024, >=2 grid programs when B>16
    so both TensorCores on v7x get work (no-op concern on v5e/v6e)."""
    if B <= 16:
        return B                      # single tile; block == full dim is legal
    half = (B + 1) // 2
    return max(8, min(1024, _round_up(half, 8)))


@functools.partial(jax.jit, static_argnames=("output_dim", "block_b"))
def decoder_forward(z, w1t, b1_2d, w2t_pad, b2_2d, *, output_dim, block_b=None):
    """Fused Decoder forward: softplus(z @ W1^T + b1) @ W2^T + b2.

    z: (B, z_dim).  The other args come from `prepare_decoder_params`.
    Returns loc_img: (B, output_dim) in z.dtype.
    """
    B, z_dim = z.shape
    _, hidden_dim = w1t.shape
    _, out_pad = w2t_pad.shape

    if block_b is None:
        block_b = _pick_block_b(B)
    grid = (pl.cdiv(B, block_b),)

    isize = np.dtype(z.dtype).itemsize
    osize = isize
    weight_bytes = 4 * (z_dim * hidden_dim + hidden_dim
                        + hidden_dim * out_pad + out_pad)

    # VMEM footprint: double-buffered z/out tiles + (double-buffered) weights.
    need = 2 * (block_b * z_dim * isize + block_b * out_pad * osize) + 2 * weight_bytes
    vmem_limit = int(min(max(2 * need + (2 << 20), 32 << 20), 128 << 20))

    cost = pl.CostEstimate(
        flops=2 * B * (z_dim * hidden_dim + hidden_dim * out_pad),
        transcendentals=B * hidden_dim,
        bytes_accessed=B * z_dim * isize + B * out_pad * osize + weight_bytes,
    )

    out = pl.pallas_call(
        _decoder_kernel,
        out_shape=jax.ShapeDtypeStruct((B, out_pad), z.dtype),
        grid=grid,
        in_specs=[
            pl.BlockSpec((block_b, z_dim), lambda i: (i, 0)),         # z tile
            pl.BlockSpec((z_dim, hidden_dim), lambda i: (0, 0)),      # W1^T
            pl.BlockSpec((1, hidden_dim), lambda i: (0, 0)),          # b1
            pl.BlockSpec((hidden_dim, out_pad), lambda i: (0, 0)),    # W2^T (padded)
            pl.BlockSpec((1, out_pad), lambda i: (0, 0)),             # b2 (padded)
        ],
        out_specs=pl.BlockSpec((block_b, out_pad), lambda i: (i, 0)),
        compiler_params=pltpu.CompilerParams(
            dimension_semantics=("parallel",),   # shard batch tiles across TCs
            vmem_limit_bytes=vmem_limit,
        ),
        cost_estimate=cost,
    )(z, w1t, b1_2d, w2t_pad, b2_2d)

    if out_pad != output_dim:
        out = out[:, :output_dim]
    return out


def _reference_forward(z, w1, b1, w2, b2):
    """Plain-JAX reference mirroring the PyTorch module semantics."""
    hidden = jax.nn.softplus(z @ w1.T + b1)
    return hidden @ w2.T + b2


if __name__ == "__main__":
    key = jax.random.PRNGKey(0)
    k_z, k_w1, k_b1, k_w2, k_b2 = jax.random.split(key, 5)

    # Small shapes consistent with the module: Decoder(z_dim=16, hidden_dim=32,
    # output_dim=64), batch of 2.
    B, z_dim, hidden_dim, output_dim = 2, 16, 32, 64

    # PyTorch nn.Linear default init: U(-1/sqrt(fan_in), 1/sqrt(fan_in)).
    bnd1 = 1.0 / float(np.sqrt(z_dim))
    bnd2 = 1.0 / float(np.sqrt(hidden_dim))
    w1 = jax.random.uniform(k_w1, (hidden_dim, z_dim), jnp.float32, -bnd1, bnd1)
    b1 = jax.random.uniform(k_b1, (hidden_dim,), jnp.float32, -bnd1, bnd1)
    w2 = jax.random.uniform(k_w2, (output_dim, hidden_dim), jnp.float32, -bnd2, bnd2)
    b2 = jax.random.uniform(k_b2, (output_dim,), jnp.float32, -bnd2, bnd2)

    z = jax.random.normal(k_z, (B, z_dim), jnp.float32)

    # One-time param prep (transpose / pad), then the fused Pallas forward.
    w1t, b1_2d, w2t_pad, b2_2d, out_dim = prepare_decoder_params(w1, b1, w2, b2)
    out = decoder_forward(z, w1t, b1_2d, w2t_pad, b2_2d, output_dim=out_dim)
    out = jax.block_until_ready(out)

    ref = _reference_forward(z, w1, b1, w2, b2)
    assert out.shape == (B, output_dim), out.shape
    assert jnp.allclose(out, ref, atol=1e-3, rtol=1e-3), "mismatch vs reference"

    print("KERNEL_OK")
</pallas_src>

<mosaic_0001>
module attributes {stable_mosaic.version = 11 : i64} {
  func.func @_decoder_kernel(%arg0: i32, %arg1: memref<2x16xf32, #tpu.memory_space<vmem>>, %arg2: memref<16x32xf32, #tpu.memory_space<vmem>>, %arg3: memref<1x32xf32, #tpu.memory_space<vmem>>, %arg4: memref<32x128xf32, #tpu.memory_space<vmem>>, %arg5: memref<1x128xf32, #tpu.memory_space<vmem>>, %arg6: memref<2x128xf32, #tpu.memory_space<vmem>>) attributes {dimension_semantics = [#tpu.dimension_semantics<parallel>], iteration_bounds = array<i64: 1>, scalar_prefetch = 0 : i64, scratch_operands = 0 : i64, tpu.core_type = #tpu.core_type<tc>, window_params = [{transform_indices = @transform_0, window_bounds = array<i64: 2, 16>}, {pipeline_mode = #tpu.pipeline_mode<synchronous>, transform_indices = @transform_1, window_bounds = array<i64: 16, 32>}, {pipeline_mode = #tpu.pipeline_mode<synchronous>, transform_indices = @transform_2, window_bounds = array<i64: 1, 32>}, {pipeline_mode = #tpu.pipeline_mode<synchronous>, transform_indices = @transform_3, window_bounds = array<i64: 32, 128>}, {pipeline_mode = #tpu.pipeline_mode<synchronous>, transform_indices = @transform_4, window_bounds = array<i64: 1, 128>}, {transform_indices = @transform_5, window_bounds = array<i64: 2, 128>}]} {
    %c0 = arith.constant 0 : index
    %c0_0 = arith.constant 0 : index
    %0 = vector.load %arg1[%c0, %c0_0] : memref<2x16xf32, #tpu.memory_space<vmem>>, vector<2x16xf32>
    %c0_1 = arith.constant 0 : index
    %c0_2 = arith.constant 0 : index
    %1 = vector.load %arg2[%c0_1, %c0_2] : memref<16x32xf32, #tpu.memory_space<vmem>>, vector<16x32xf32>
    %cst = arith.constant dense<0.000000e+00> : vector<2x32xf32>
    %2 = tpu.matmul %0, %1, %cst {dimension_numbers = #tpu.dot_dimension_numbers<[1], [0], [0], [1], [0, 0, 1, 1], [], []>} : vector<2x16xf32>, vector<16x32xf32>, vector<2x32xf32> -> vector<2x32xf32>
    %c0_3 = arith.constant 0 : index
    %c0_4 = arith.constant 0 : index
    %3 = vector.load %arg3[%c0_3, %c0_4] : memref<1x32xf32, #tpu.memory_space<vmem>>, vector<1x32xf32>
    %4 = vector.broadcast %3 : vector<1x32xf32> to vector<2x32xf32>
    %5 = arith.addf %2, %4 : vector<2x32xf32>
    %cst_5 = arith.constant 0.000000e+00 : f32
    %6 = vector.broadcast %cst_5 : f32 to vector<2x32xf32>
    %7 = arith.maximumf %5, %6 : vector<2x32xf32>
    %8 = vector.broadcast %cst_5 : f32 to vector<2x32xf32>
    %9 = arith.subf %5, %8 : vector<2x32xf32>
    %10 = arith.cmpf one, %9, %9 : vector<2x32xf32>
    %11 = vector.broadcast %cst_5 : f32 to vector<2x32xf32>
    %12 = arith.addf %5, %11 : vector<2x32xf32>
    %13 = math.absf %9 : vector<2x32xf32>
    %cst_6 = arith.constant 0.000000e+00 : f32
    %14 = vector.broadcast %cst_6 : f32 to vector<2x32xf32>
    %15 = arith.subf %14, %13 : vector<2x32xf32>
    %16 = math.exp %15 : vector<2x32xf32>
    %17 = math.log1p %16 : vector<2x32xf32>
    %18 = arith.addf %7, %17 : vector<2x32xf32>
    %19 = arith.select %10, %12, %18 : vector<2x32xi1>, vector<2x32xf32>
    %c0_7 = arith.constant 0 : index
    %c0_8 = arith.constant 0 : index
    %20 = vector.load %arg4[%c0_7, %c0_8] : memref<32x128xf32, #tpu.memory_space<vmem>>, vector<32x128xf32>
    %cst_9 = arith.constant dense<0.000000e+00> : vector<2x128xf32>
    %21 = tpu.matmul %19, %20, %cst_9 {dimension_numbers = #tpu.dot_dimension_numbers<[1], [0], [0], [1], [0, 0, 1, 1], [], []>} : vector<2x32xf32>, vector<32x128xf32>, vector<2x128xf32> -> vector<2x128xf32>
    %c0_10 = arith.constant 0 : index
    %c0_11 = arith.constant 0 : index
    %22 = vector.load %arg5[%c0_10, %c0_11] : memref<1x128xf32, #tpu.memory_space<vmem>>, vector<1x128xf32>
    %23 = vector.broadcast %22 : vector<1x128xf32> to vector<2x128xf32>
    %24 = arith.addf %21, %23 : vector<2x128xf32>
    %c0_12 = arith.constant 0 : index
    %c0_13 = arith.constant 0 : index
    %25 = vector.load %arg6[%c0_12, %c0_13] : memref<2x128xf32, #tpu.memory_space<vmem>>, vector<2x128xf32>
    tpu.vector_store %arg6[%c0_12, %c0_13], %24 {strides = array<i32>} : memref<2x128xf32, #tpu.memory_space<vmem>>, vector<2x128xf32>,
    return
  }
  func.func @transform_0(%arg0: i32) -> (i32, i32) {
    %c0_i32 = arith.constant 0 : i32
    %c0_i32_0 = arith.constant 0 : i32
    return %arg0, %c0_i32 : i32, i32
  }
  func.func @transform_1(%arg0: i32) -> (i32, i32) {
    %c0_i32 = arith.constant 0 : i32
    %c0_i32_0 = arith.constant 0 : i32
    %c0_i32_1 = arith.constant 0 : i32
    return %c0_i32, %c0_i32_0 : i32, i32
  }
  func.func @transform_2(%arg0: i32) -> (i32, i32) {
    %c0_i32 = arith.constant 0 : i32
    %c0_i32_0 = arith.constant 0 : i32
    %c0_i32_1 = arith.constant 0 : i32
    return %c0_i32, %c0_i32_0 : i32, i32
  }
  func.func @transform_3(%arg0: i32) -> (i32, i32) {
    %c0_i32 = arith.constant 0 : i32
    %c0_i32_0 = arith.constant 0 : i32
    %c0_i32_1 = arith.constant 0 : i32
    return %c0_i32, %c0_i32_0 : i32, i32
  }
  func.func @transform_4(%arg0: i32) -> (i32, i32) {
    %c0_i32 = arith.constant 0 : i32
    %c0_i32_0 = arith.constant 0 : i32
    %c0_i32_1 = arith.constant 0 : i32
    return %c0_i32, %c0_i32_0 : i32, i32
  }
  func.func @transform_5(%arg0: i32) -> (i32, i32) {
    %c0_i32 = arith.constant 0 : i32
    %c0_i32_0 = arith.constant 0 : i32
    return %arg0, %c0_i32 : i32, i32
  }
}

</mosaic_0001>

<llo_original>
// kernel: decoder_forward.1
$region0: #{decoder_forward.1}
  #allocation0 [shape = 'u32[]', space=smem, size = 0x4, offset = 0x4, fixed_abs, tag = 'smem constant byte address 0x4 - core index']
  #allocation1 [shape = 'u32[144,128]{1,0:T(1,128)}', space=vmem, size = 0x12000, scoped, tag = 'internal scratch']
  %s0 = inlined_call_operand.hbm [shape: f32[2,16], index: 0, kind: input, shape index: {}]
  %s1 = inlined_call_operand.hbm [shape: f32[16,32], index: 1, kind: input, shape index: {}]
  %s2 = inlined_call_operand.vmem [shape: f32[1,32], index: 2, kind: input, shape index: {}]
  %s3 = inlined_call_operand.hbm [shape: f32[32,128], index: 3, kind: input, shape index: {}]
  %s4 = inlined_call_operand.vmem [shape: f32[1,128], index: 4, kind: input, shape index: {}]
  %s5 = inlined_call_operand.hbm [shape: f32[2,128], index: 5, kind: output, shape index: {}]
  %s6 = sld [smem:[#allocation0]]
  $region42: #{decoder_forward.1} parent=0
    _
  %s8 = ssub.s32 1, %s6
  %s9 = scalar_select 0, %s8, %s6
  $region1: #{decoder_forward.1} parent=0
    #allocation2 [shape = 'u8[1024]{0}', space=vmem, size = 0x400, scoped, tag = 'input window, operand 0, single buffered']
    #allocation3 [shape = 's32[1]{0}', space=sflag, size = 0x4, scoped, tag = 'scoped memory for decoder_forward.1']
    #allocation4 [shape = 's32[1]{0}', space=sflag, size = 0x4, scoped, tag = 'scoped memory for decoder_forward.1']
    #allocation5 [shape = 'u8[8192]{0}', space=vmem, size = 0x2000, scoped, tag = 'input window, operand 1, single buffered']
    #allocation6 [shape = 's32[1]{0}', space=sflag, size = 0x4, scoped, tag = 'scoped memory for decoder_forward.1']
    #allocation7 [shape = 'u8[16384]{0}', space=vmem, size = 0x4000, scoped, tag = 'input window, operand 3, single buffered']
    #allocation8 [shape = 'u8[1024]{0}', space=vmem, size = 0x400, scoped, tag = 'output window, operand 0, single buffered']
    %10 = vsyncpa [#allocation3], 0
    %11 = vsyncpa [#allocation6], 0
    %12 = vsyncpa [#allocation4], 0
    // Predicated region
    $region2: #{decoder_forward.1} parent=1 // pred_check
      _
    $region3: #{decoder_forward.1} parent=1 // pred_check_branch
      %14 = sbr.rel (0) target = $region5
    $region4: #{decoder_forward.1} parent=1 // pred_region
      %s16 = ssub.s32 32, 32
      %17 = vsyncadd [#allocation3], %s16
      %s19 = sshll.u32 [#allocation2], 4
      %s20 = int_to_ptr.vmem [resolvable:$true] %s19
      %22 = dma.hbm_to_vmem [thread:$0]  %s0, 32, %s20, [#allocation3]
    $region5: #{decoder_forward.1} parent=1 // pred_fallthru
      _
    // Predicated region
    $region6: #{decoder_forward.1} parent=1 // pred_check
      _
    $region7: #{decoder_forward.1} parent=1 // pred_check_branch
      %24 = sbr.rel (0) target = $region9
    $region8: #{decoder_forward.1} parent=1 // pred_region
      %s26 = ssub.s32 256, 256
      %27 = vsyncadd [#allocation6], %s26
      %s28 = sshll.u32 [#allocation5], 4
      %s29 = int_to_ptr.vmem [resolvable:$true] %s28
      %34 = dma.hbm_to_vmem [thread:$0]  %s1, 256, %s29, [#allocation6], 128, 128, 8
    $region9: #{decoder_forward.1} parent=1 // pred_fallthru
      _
    // Predicated region
    $region10: #{decoder_forward.1} parent=1 // pred_check
      _
    $region11: #{decoder_forward.1} parent=1 // pred_check_branch
      %36 = sbr.rel (0) target = $region13
    $region12: #{decoder_forward.1} parent=1 // pred_region
      _
    $region13: #{decoder_forward.1} parent=1 // pred_fallthru
      _
    // Predicated region
    $region14: #{decoder_forward.1} parent=1 // pred_check
      _
    $region15: #{decoder_forward.1} parent=1 // pred_check_branch
      %38 = sbr.rel (0) target = $region17
    $region16: #{decoder_forward.1} parent=1 // pred_region
      %s40 = ssub.s32 512, 512
      %41 = vsyncadd [#allocation6], %s40
      %s42 = sshll.u32 [#allocation7], 4
      %s43 = int_to_ptr.vmem [resolvable:$true] %s42
      %48 = dma.hbm_to_vmem [thread:$0]  %s3, 512, %s43, [#allocation6], 128, 128, 8
    $region17: #{decoder_forward.1} parent=1 // pred_fallthru
      _
    // Predicated region
    $region18: #{decoder_forward.1} parent=1 // pred_check
      _
    $region19: #{decoder_forward.1} parent=1 // pred_check_branch
      %50 = sbr.rel (0) target = $region21
    $region20: #{decoder_forward.1} parent=1 // pred_region
      _
    $region21: #{decoder_forward.1} parent=1 // pred_fallthru
      _
    // Predicated region
    $region22: #{decoder_forward.1} parent=1 // pred_check
      _
    $region23: #{decoder_forward.1} parent=1 // pred_check_branch
      %52 = sbr.rel (0) target = $region25
    $region24: #{decoder_forward.1} parent=1 // pred_region
      %53 = dma.done [#allocation3], 32
    $region25: #{decoder_forward.1} parent=1 // pred_fallthru
      _
    // Predicated region
    $region26: #{decoder_forward.1} parent=1 // pred_check
      _
    $region27: #{decoder_forward.1} parent=1 // pred_check_branch
      %55 = sbr.rel (0) target = $region29
    $region28: #{decoder_forward.1} parent=1 // pred_region
      %56 = dma.done [#allocation6], 256
    $region29: #{decoder_forward.1} parent=1 // pred_fallthru
      _
    // Predicated region
    $region30: #{decoder_forward.1} parent=1 // pred_check
      _
    $region31: #{decoder_forward.1} parent=1 // pred_check_branch
      %58 = sbr.rel (0) target = $region33
    $region32: #{decoder_forward.1} parent=1 // pred_region
      %59 = dma.done [#allocation6], 512
    $region33: #{decoder_forward.1} parent=1 // pred_fallthru
      _
    %v60 = vld [vmem:[#allocation2] sm:$0x3]
    %v61 = vld [vmem:[#allocation5] sm:$0xff]
    %v62 = vld [vmem:[#allocation5 + $0x8] sm:$0xff]
    %v63 = vld [vmem:[%s2] sm:$0x1]
    %v65 = vlaneseq
    %v66 = vshrl.u32 %v65, 7
    %v67 = vsub.s32 0, %v66
    %v68 = vrot.slane %v63, %v67
    %vm70 = vcmask 130048
    %v72 = vsel %vm70, %v60, 0
    %74 = vmatprep.subr.mxu0 0.0
    %75 = vmatpush1.msra.mxu0 %v61
    %76 = vmatprep.subr.mxu0 0.0
    %77 = vmatpush1.msra.mxu0 %v62
    %78 = vmatprep.subr.mxu0 0.0
    %79 = vmatpush1.msra.mxu0 0.0
    %80 = vmatprep.subr.mxu0 0.0
    %81 = vmatpush1.msra.mxu0 0.0
    %82 = vmatprep.subr.mxu0 0.0
    %83 = vmatpush1.msra.mxu0 0.0
    %84 = vmatprep.subr.mxu0 0.0
    %85 = vmatpush1.msra.mxu0 0.0
    %86 = vmatprep.subr.mxu0 0.0
    %87 = vmatpush1.msra.mxu0 0.0
    %88 = vmatprep.subr.mxu0 0.0
    %89 = vmatpush1.msra.mxu0 0.0
    %90 = vmatprep.subr.mxu0 0.0
    %91 = vmatpush1.msra.mxu0 0.0
    %92 = vmatprep.subr.mxu0 0.0
    %93 = vmatpush1.msra.mxu0 0.0
    %94 = vmatprep.subr.mxu0 0.0
    %95 = vmatpush1.msra.mxu0 0.0
    %96 = vmatprep.subr.mxu0 0.0
    %97 = vmatpush1.msra.mxu0 0.0
    %98 = vmatprep.subr.mxu0 0.0
    %99 = vmatpush1.msra.mxu0 0.0
    %100 = vmatprep.subr.mxu0 0.0
    %101 = vmatpush1.msra.mxu0 0.0
    %102 = vmatprep.subr.mxu0 0.0
    %103 = vmatpush1.msra.mxu0 0.0
    %104 = vmatprep.subr.mxu0 0.0
    %105 = vmatpush1.msra.mxu0 0.0
    %106 = vmatprep.subr.mxu0 0.0
    %107 = vmatpush1.msra.mxu0 0.0
    %108 = vmatprep.subr.mxu0 0.0
    %109 = vmatpush1.msra.mxu0 0.0
    %110 = vmatprep.subr.mxu0 0.0
    %111 = vmatpush1.msra.mxu0 0.0
    %112 = vmatprep.subr.mxu0 0.0
    %113 = vmatpush1.msra.mxu0 0.0
    %114 = vmatprep.subr.mxu0 0.0
    %115 = vmatpush1.msra.mxu0 0.0
    %116 = vmatprep.subr.mxu0 0.0
    %117 = vmatpush1.msra.mxu0 0.0
    %118 = vmatprep.subr.mxu0 0.0
    %119 = vmatpush1.msra.mxu0 0.0
    %120 = vmatprep.subr.mxu0 0.0
    %121 = vmatpush1.msra.mxu0 0.0
    %122 = vmatprep.subr.mxu0 0.0
    %123 = vmatpush1.msra.mxu0 0.0
    %124 = vmatprep.subr.mxu0 0.0
    %125 = vmatpush1.msra.mxu0 0.0
    %126 = vmatprep.subr.mxu0 0.0
    %127 = vmatpush1.msra.mxu0 0.0
    %128 = vmatprep.subr.mxu0 0.0
    %129 = vmatpush1.msra.mxu0 0.0
    %130 = vmatprep.subr.mxu0 0.0
    %131 = vmatpush1.msra.mxu0 0.0
    %132 = vmatprep.subr.mxu0 0.0
    %133 = vmatpush1.msra.mxu0 0.0
    %134 = vmatprep.subr.mxu0 0.0
    %135 = vmatpush1.msra.mxu0 0.0
    %136 = vmatprep.subr.mxu0 0.0
    %137 = vmatpush1.msra.mxu0 0.0
    %138 = vmatprep.mubr.f32.mxu0 0.0
    %139 = vmatmul.mubr.f32.gmra.mrb[0].mxu0 %v72
    %v140 = vpop.f32.mrb[0].mxu0
    %v141 = vadd.f32 %v68, %v140
    %v142 = vpop.f32.mrb[0].mxu0
    %143 = vdwg.mxu0
    %v144 = vmax.f32 %v141, 0.0
    %vm145 = vcmp.ne.f32.partialorder %v141, %v141
    %v146 = vadd.f32 %v141, 0.0
    %v147 = vand.u32 2147483647, %v141
    %v148 = vsub.f32 0.0, %v147
    %v149 = vmul.f32 %v148, 1.442695
    %v150 = vpow.pop %v149
    %v151 = vadd.f32 %v150, 1.0
    %v152 = vlog2.pop %v151
    %v153 = vmul.f32 %v152, 0.6931472
    %v154 = vmul.f32 -0.5, %v150
    %v155 = vadd.f32 %v154, 1.0
    %v156 = vmul.f32 %v155, %v150
    %v157 = vand.u32 2147483647, %v150
    %vm158 = vcmp.lt.f32.partialorder %v157, 0.0004427343
    %v159 = vsel %vm158, %v156, %v153
    %v160 = vadd.f32 %v144, %v159
    %v161 = vsel %vm145, %v146, %v160
    %v162 = vld [vmem:[#allocation7] sm:$0xff]
    %v163 = vld [vmem:[#allocation7 + $0x8] sm:$0xff]
    %v164 = vld [vmem:[#allocation7 + $0x10] sm:$0xff]
    %v165 = vld [vmem:[#allocation7 + $0x18] sm:$0xff]
    %v166 = vld [vmem:[%s4] sm:$0x1]
    %v168 = vlaneseq
    %v169 = vshrl.u32 %v168, 7
    %v170 = vsub.s32 0, %v169
    %v171 = vrot.slane %v166, %v170
    %vm173 = vcmask 261120
    %v175 = vsel %vm173, %v161, 0
    %177 = vmatprep.subr.mxu0 0.0
    %178 = vmatpush1.msra.mxu0 %v162
    %179 = vmatprep.subr.mxu0 0.0
    %180 = vmatpush1.msra.mxu0 %v163
    %181 = vmatprep.subr.mxu0 0.0
    %182 = vmatpush1.msra.mxu0 %v164
    %183 = vmatprep.subr.mxu0 0.0
    %184 = vmatpush1.msra.mxu0 %v165
    %185 = vmatprep.subr.mxu0 0.0
    %186 = vmatpush1.msra.mxu0 0.0
    %187 = vmatprep.subr.mxu0 0.0
    %188 = vmatpush1.msra.mxu0 0.0
    %189 = vmatprep.subr.mxu0 0.0
    %190 = vmatpush1.msra.mxu0 0.0
    %191 = vmatprep.subr.mxu0 0.0
    %192 = vmatpush1.msra.mxu0 0.0
    %193 = vmatprep.subr.mxu0 0.0
    %194 = vmatpush1.msra.mxu0 0.0
    %195 = vmatprep.subr.mxu0 0.0
    %196 = vmatpush1.msra.mxu0 0.0
    %197 = vmatprep.subr.mxu0 0.0
    %198 = vmatpush1.msra.mxu0 0.0
    %199 = vmatprep.subr.mxu0 0.0
    %200 = vmatpush1.msra.mxu0 0.0
    %201 = vmatprep.subr.mxu0 0.0
    %202 = vmatpush1.msra.mxu0 0.0
    %203 = vmatprep.subr.mxu0 0.0
    %204 = vmatpush1.msra.mxu0 0.0
    %205 = vmatprep.subr.mxu0 0.0
    %206 = vmatpush1.msra.mxu0 0.0
    %207 = vmatprep.subr.mxu0 0.0
    %208 = vmatpush1.msra.mxu0 0.0
    %209 = vmatprep.subr.mxu0 0.0
    %210 = vmatpush1.msra.mxu0 0.0
    %211 = vmatprep.subr.mxu0 0.0
    %212 = vmatpush1.msra.mxu0 0.0
    %213 = vmatprep.subr.mxu0 0.0
    %214 = vmatpush1.msra.mxu0 0.0
    %215 = vmatprep.subr.mxu0 0.0
    %216 = vmatpush1.msra.mxu0 0.0
    %217 = vmatprep.subr.mxu0 0.0
    %218 = vmatpush1.msra.mxu0 0.0
    %219 = vmatprep.subr.mxu0 0.0
    %220 = vmatpush1.msra.mxu0 0.0
    %221 = vmatprep.subr.mxu0 0.0
    %222 = vmatpush1.msra.mxu0 0.0
    %223 = vmatprep.subr.mxu0 0.0
    %224 = vmatpush1.msra.mxu0 0.0
    %225 = vmatprep.subr.mxu0 0.0
    %226 = vmatpush1.msra.mxu0 0.0
    %227 = vmatprep.subr.mxu0 0.0
    %228 = vmatpush1.msra.mxu0 0.0
    %229 = vmatprep.subr.mxu0 0.0
    %230 = vmatpush1.msra.mxu0 0.0
    %231 = vmatprep.subr.mxu0 0.0
    %232 = vmatpush1.msra.mxu0 0.0
    %233 = vmatprep.subr.mxu0 0.0
    %234 = vmatpush1.msra.mxu0 0.0
    %235 = vmatprep.subr.mxu0 0.0
    %236 = vmatpush1.msra.mxu0 0.0
    %237 = vmatprep.subr.mxu0 0.0
    %238 = vmatpush1.msra.mxu0 0.0
    %239 = vmatprep.subr.mxu0 0.0
    %240 = vmatpush1.msra.mxu0 0.0
    %241 = vmatprep.mubr.f32.mxu0 0.0
    %242 = vmatmul.mubr.f32.gmra.mrb[0].mxu0 %v175
    %v243 = vpop.f32.mrb[0].mxu0
    %v244 = vadd.f32 %v171, %v243
    %v245 = vpop.f32.mrb[0].mxu0
    %246 = vdwg.mxu0
    %247 = vst [vmem:[#allocation8] sm:$0x3] %v244
    // Predicated region
    $region34: #{decoder_forward.1} parent=1 // pred_check
      _
    $region35: #{decoder_forward.1} parent=1 // pred_check_branch
      %249 = sbr.rel (0) target = $region37
    $region36: #{decoder_forward.1} parent=1 // pred_region
      %s251 = ssub.s32 32, 32
      %252 = vsyncadd [#allocation4], %s251
      %s254 = sshll.u32 [#allocation8], 4
      %s255 = int_to_ptr.vmem [resolvable:$true] %s254
      %257 = dma.vmem_to_hbm [thread:$0]  %s255, 32, %s5, [#allocation4]
    $region37: #{decoder_forward.1} parent=1 // pred_fallthru
      _
    // Predicated region
    $region38: #{decoder_forward.1} parent=1 // pred_check
      _
    $region39: #{decoder_forward.1} parent=1 // pred_check_branch
      %259 = sbr.rel (0) target = $region41
    $region40: #{decoder_forward.1} parent=1 // pred_region
      %260 = dma.done [#allocation4], 32
    $region41: #{decoder_forward.1} parent=1 // pred_fallthru
      _
    %261 = vsyncpa [#allocation3], 1
    %262 = vsyncpa [#allocation6], 1
    %263 = vsyncpa [#allocation4], 1

</llo_original>
